<compile_context>
chip_gen: v6e
topology: v6e:2x2x1
jax: 0.10.0
libtpu: 0.0.40
codegen_flags: <defaults>
</compile_context>

<pallas_src>
import functools

import jax
import jax.numpy as jnp
from jax.experimental import pallas as pl
from jax.experimental.pallas import tpu as pltpu


# ----------------------------------------------------------------------------
# In-kernel helpers
# ----------------------------------------------------------------------------
def _softmax_last(x):
    """Numerically stable softmax over the last axis (matches F.softmax)."""
    m = jnp.max(x, axis=-1, keepdims=True)
    e = jnp.exp(x - m)
    # exact reciprocal: keeps tolerance vs. the f32 reference
    return e * pl.reciprocal(jnp.sum(e, axis=-1, keepdims=True), approx=False)


# ----------------------------------------------------------------------------
# Kernels.  Per grid step: h (TB,H), enc (S,TB,H) in native layout, out (TB,S).
# ----------------------------------------------------------------------------
def _dot_kernel(h_ref, enc_ref, out_ref):
    h = h_ref[...]                                                   # (TB, H)
    scores_sb = jnp.sum(enc_ref[...] * h[None, :, :], axis=-1)       # (S, TB)
    out_ref[...] = _softmax_last(scores_sb.T)                        # (TB, S)


def _general_kernel(h_ref, enc_ref, w_ref, b_ref, out_ref):
    # Factored form: never builds the (S,TB,H) energy tensor.
    h = h_ref[...]                                                   # (TB, H)
    u = jnp.dot(h, w_ref[...], preferred_element_type=jnp.float32)   # (TB, H)
    hb = h * b_ref[...]                                              # (TB, H)  bias term: sum_j h_j*b_j
    scores_sb = jnp.sum(enc_ref[...] * u[None, :, :] + hb[None, :, :],
                        axis=-1)                                     # (S, TB)
    out_ref[...] = _softmax_last(scores_sb.T)                        # (TB, S)


def _concat_kernel(h_ref, enc_ref, wht_ref, wet_ref, b_ref, v_ref, out_ref):
    # wht/wet are ALREADY transposed halves of the Linear(2H->H) weight.
    h_part = jnp.dot(h_ref[...], wht_ref[...],
                     preferred_element_type=jnp.float32) + b_ref[...]  # (TB, H)
    wet = wet_ref[...]
    v = v_ref[...]                                                     # (1, H)
    cols = []
    for s in range(enc_ref.shape[0]):          # static small S; 2-D MXU matmuls only
        e_part = jnp.dot(enc_ref[s], wet, preferred_element_type=jnp.float32)
        energy = jnp.tanh(h_part + e_part)                             # (TB, H)
        cols.append(jnp.sum(v * energy, axis=-1, keepdims=True))       # (TB, 1)
    out_ref[...] = _softmax_last(jnp.concatenate(cols, axis=-1))       # (TB, S)


# ----------------------------------------------------------------------------
# Wrapper: grid over batch tiles, encoder_outputs kept in (S, B, H) layout.
# ----------------------------------------------------------------------------
@functools.partial(jax.jit, static_argnames=("method",))
def attn_forward(method, hidden, encoder_outputs, params):
    """hidden: (1, B, H)  encoder_outputs: (S, B, H)  ->  (B, 1, S)."""
    h = hidden[0]                                   # (B, H)
    S, B, H = encoder_outputs.shape

    # Batch tile: full batch when small, else 8-row (sublane) tiles.
    tb = 8 if (B > 8 and B % 8 == 0) else B
    grid = (B // tb,)

    h_spec = pl.BlockSpec((tb, H), lambda i: (i, 0))
    enc_spec = pl.BlockSpec((S, tb, H), lambda i: (0, i, 0))
    out_spec = pl.BlockSpec((tb, S), lambda i: (i, 0))
    out_shape = jax.ShapeDtypeStruct((B, S), jnp.float32)
    cp = pltpu.CompilerParams(dimension_semantics=("parallel",))

    def const2d(shape):
        # Whole-array block, same block every grid step (stays resident).
        return pl.BlockSpec(shape, lambda i: (0, 0))

    if method == "dot":
        scores = pl.pallas_call(
            _dot_kernel, out_shape=out_shape, grid=grid,
            in_specs=[h_spec, enc_spec], out_specs=out_spec,
            compiler_params=cp,
        )(h, encoder_outputs)
    elif method == "general":
        w, b = params["attn_w"], params["attn_b"]   # nn.Linear(H->H) weight/bias
        scores = pl.pallas_call(
            _general_kernel, out_shape=out_shape, grid=grid,
            in_specs=[h_spec, enc_spec, const2d((H, H)), const2d((1, H))],
            out_specs=out_spec, compiler_params=cp,
        )(h, encoder_outputs, w, b.reshape(1, H))
    elif method == "concat":
        w, b, v = params["attn_w"], params["attn_b"], params["v"]
        wh_t = w[:, :H].T                           # (H, H), transposed once in XLA
        we_t = w[:, H:].T                           # (H, H)
        scores = pl.pallas_call(
            _concat_kernel, out_shape=out_shape, grid=grid,
            in_specs=[h_spec, enc_spec, const2d((H, H)), const2d((H, H)),
                      const2d((1, H)), const2d((1, H))],
            out_specs=out_spec, compiler_params=cp,
        )(h, encoder_outputs, wh_t, we_t, b.reshape(1, H), v.reshape(1, H))
    else:
        raise ValueError(method)

    return scores[:, None, :]                       # (B, 1, S)


# ----------------------------------------------------------------------------
# Pure-JAX reference (mirrors the PyTorch module exactly)
# ----------------------------------------------------------------------------
def attn_reference(method, hidden, encoder_outputs, params):
    if method == "dot":
        energies = jnp.sum(hidden * encoder_outputs, axis=2)            # (S, B)
    elif method == "general":
        energy = encoder_outputs @ params["attn_w"].T + params["attn_b"]
        energies = jnp.sum(hidden * energy, axis=2)
    elif method == "concat":
        S = encoder_outputs.shape[0]
        h_exp = jnp.broadcast_to(hidden, (S,) + hidden.shape[1:])
        cat = jnp.concatenate([h_exp, encoder_outputs], axis=2)
        energy = jnp.tanh(cat @ params["attn_w"].T + params["attn_b"])
        energies = jnp.sum(params["v"] * energy, axis=2)
    energies = energies.T                                               # (B, S)
    return jax.nn.softmax(energies, axis=1)[:, None, :]                 # (B, 1, S)


# ----------------------------------------------------------------------------
# Main
# ----------------------------------------------------------------------------
if __name__ == "__main__":
    S, B, H = 8, 4, 32  # small version of the (10, 5, 500) shapes in the docstring

    key = jax.random.PRNGKey(0)
    k_h, k_e, k_w1, k_b1, k_w2, k_b2, k_v = jax.random.split(key, 7)

    hidden = jax.random.normal(k_h, (1, B, H), dtype=jnp.float32)
    encoder_outputs = jax.random.normal(k_e, (S, B, H), dtype=jnp.float32)

    params_by_method = {
        "dot": {},
        "general": {
            "attn_w": jax.random.normal(k_w1, (H, H), jnp.float32) * 0.1,
            "attn_b": jax.random.normal(k_b1, (H,), jnp.float32) * 0.1,
        },
        "concat": {
            "attn_w": jax.random.normal(k_w2, (H, 2 * H), jnp.float32) * 0.1,
            "attn_b": jax.random.normal(k_b2, (H,), jnp.float32) * 0.1,
            "v": jax.random.normal(k_v, (H,), jnp.float32) * 0.1,
        },
    }

    for method in ("dot", "general", "concat"):
        params = params_by_method[method]
        out = attn_forward(method, hidden, encoder_outputs, params)
        out = jax.block_until_ready(out)
        ref = attn_reference(method, hidden, encoder_outputs, params)
        assert out.shape == (B, 1, S), (method, out.shape)
        # Tolerance leaves margin for MXU default-precision reordering in the
        # algebraically refactored matmuls.
        assert jnp.allclose(out, ref, atol=1e-4, rtol=1e-4), method
        # attention weights sum to 1 over the sequence axis
        assert jnp.allclose(jnp.sum(out, axis=-1), 1.0, atol=1e-5), method

    print("KERNEL_OK")
</pallas_src>

<mosaic_0001>
module attributes {stable_mosaic.version = 11 : i64} {
  func.func @_dot_kernel(%arg0: i32, %arg1: memref<4x32xf32, #tpu.memory_space<vmem>>, %arg2: memref<8x4x32xf32, #tpu.memory_space<vmem>>, %arg3: memref<4x8xf32, #tpu.memory_space<vmem>>) attributes {dimension_semantics = [#tpu.dimension_semantics<parallel>], iteration_bounds = array<i64: 1>, scalar_prefetch = 0 : i64, scratch_operands = 0 : i64, tpu.core_type = #tpu.core_type<tc>, window_params = [{transform_indices = @transform_0, window_bounds = array<i64: 4, 32>}, {transform_indices = @transform_1, window_bounds = array<i64: 8, 4, 32>}, {transform_indices = @transform_2, window_bounds = array<i64: 4, 8>}]} {
    %c0 = arith.constant 0 : index
    %c0_0 = arith.constant 0 : index
    %0 = vector.load %arg1[%c0, %c0_0] : memref<4x32xf32, #tpu.memory_space<vmem>>, vector<4x32xf32>
    %c0_1 = arith.constant 0 : index
    %c0_2 = arith.constant 0 : index
    %c0_3 = arith.constant 0 : index
    %1 = vector.load %arg2[%c0_1, %c0_2, %c0_3] : memref<8x4x32xf32, #tpu.memory_space<vmem>>, vector<8x4x32xf32>
    %2 = vector.shape_cast %0 : vector<4x32xf32> to vector<1x4x32xf32>
    %3 = vector.broadcast %2 : vector<1x4x32xf32> to vector<8x4x32xf32>
    %4 = arith.mulf %1, %3 : vector<8x4x32xf32>
    %cst = arith.constant dense<0.000000e+00> : vector<8x4xf32>
    %5 = vector.multi_reduction <add>, %4, %cst [2] : vector<8x4x32xf32> to vector<8x4xf32>
    %6 = tpu.transpose %5, [1, 0] : vector<8x4xf32> -> vector<4x8xf32>
    %cst_4 = arith.constant dense<0xFF800000> : vector<4xf32>
    %7 = vector.multi_reduction <maximumf>, %6, %cst_4 [1] : vector<4x8xf32> to vector<4xf32>
    %8 = vector.shape_cast %7 : vector<4xf32> to vector<4x1xf32>
    %9 = vector.broadcast %8 : vector<4x1xf32> to vector<4x8xf32>
    %10 = arith.subf %6, %9 : vector<4x8xf32>
    %11 = math.exp %10 : vector<4x8xf32>
    %cst_5 = arith.constant dense<0.000000e+00> : vector<4xf32>
    %12 = vector.multi_reduction <add>, %11, %cst_5 [1] : vector<4x8xf32> to vector<4xf32>
    %13 = vector.shape_cast %12 : vector<4xf32> to vector<4x1xf32>
    %14 = tpu.reciprocal %13 : vector<4x1xf32> -> vector<4x1xf32>
    %15 = vector.broadcast %14 : vector<4x1xf32> to vector<4x8xf32>
    %16 = arith.mulf %11, %15 : vector<4x8xf32>
    %c0_6 = arith.constant 0 : index
    %c0_7 = arith.constant 0 : index
    %17 = vector.load %arg3[%c0_6, %c0_7] : memref<4x8xf32, #tpu.memory_space<vmem>>, vector<4x8xf32>
    tpu.vector_store %arg3[%c0_6, %c0_7], %16 {strides = array<i32>} : memref<4x8xf32, #tpu.memory_space<vmem>>, vector<4x8xf32>,
    return
  }
  func.func @transform_0(%arg0: i32) -> (i32, i32) {
    %c0_i32 = arith.constant 0 : i32
    %c0_i32_0 = arith.constant 0 : i32
    return %arg0, %c0_i32 : i32, i32
  }
  func.func @transform_1(%arg0: i32) -> (i32, i32, i32) {
    %c0_i32 = arith.constant 0 : i32
    %c0_i32_0 = arith.constant 0 : i32
    %c0_i32_1 = arith.constant 0 : i32
    return %c0_i32, %arg0, %c0_i32_0 : i32, i32, i32
  }
  func.func @transform_2(%arg0: i32) -> (i32, i32) {
    %c0_i32 = arith.constant 0 : i32
    %c0_i32_0 = arith.constant 0 : i32
    return %arg0, %c0_i32 : i32, i32
  }
}

</mosaic_0001>

<llo_original>
// kernel: attn_forward.1
$region0: #{attn_forward.1}
  #allocation0 [shape = 'u32[]', space=smem, size = 0x4, offset = 0x4, fixed_abs, tag = 'smem constant byte address 0x4 - core index']
  #allocation1 [shape = 'u32[144,128]{1,0:T(1,128)}', space=vmem, size = 0x12000, scoped, tag = 'internal scratch']
  %s0 = inlined_call_operand.hbm [shape: f32[4,32], index: 0, kind: input, shape index: {}]
  %s1 = inlined_call_operand.hbm [shape: f32[8,4,32], index: 1, kind: input, shape index: {}]
  %s2 = inlined_call_operand.hbm [shape: f32[4,8], index: 2, kind: output, shape index: {}]
  %s3 = sld [smem:[#allocation0]]
  $region26: #{attn_forward.1} parent=0
    _
  %s5 = ssub.s32 1, %s3
  %s6 = scalar_select 0, %s5, %s3
  $region1: #{attn_forward.1} parent=0
    #allocation2 [shape = 'u8[2048]{0}', space=vmem, size = 0x800, scoped, tag = 'input window, operand 0, single buffered']
    #allocation3 [shape = 's32[1]{0}', space=sflag, size = 0x4, scoped, tag = 'scoped memory for attn_forward.1']
    #allocation4 [shape = 's32[1]{0}', space=sflag, size = 0x4, scoped, tag = 'scoped memory for attn_forward.1']
    #allocation5 [shape = 'u8[16384]{0}', space=vmem, size = 0x4000, scoped, tag = 'input window, operand 1, single buffered']
    #allocation6 [shape = 's32[1]{0}', space=sflag, size = 0x4, scoped, tag = 'scoped memory for attn_forward.1']
    #allocation7 [shape = 'u8[2048]{0}', space=vmem, size = 0x800, scoped, tag = 'output window, operand 0, single buffered']
    %7 = vsyncpa [#allocation3], 0
    %8 = vsyncpa [#allocation6], 0
    %9 = vsyncpa [#allocation4], 0
    // Predicated region
    $region2: #{attn_forward.1} parent=1 // pred_check
      _
    $region3: #{attn_forward.1} parent=1 // pred_check_branch
      %11 = sbr.rel (0) target = $region5
    $region4: #{attn_forward.1} parent=1 // pred_region
      %s13 = ssub.s32 64, 64
      %14 = vsyncadd [#allocation3], %s13
      %s16 = sshll.u32 [#allocation2], 4
      %s17 = int_to_ptr.vmem [resolvable:$true] %s16
      %19 = dma.hbm_to_vmem [thread:$0]  %s0, 64, %s17, [#allocation3]
    $region5: #{attn_forward.1} parent=1 // pred_fallthru
      _
    // Predicated region
    $region6: #{attn_forward.1} parent=1 // pred_check
      _
    $region7: #{attn_forward.1} parent=1 // pred_check_branch
      %21 = sbr.rel (0) target = $region9
    $region8: #{attn_forward.1} parent=1 // pred_region
      %s23 = ssub.s32 512, 512
      %24 = vsyncadd [#allocation6], %s23
      %s25 = sshll.u32 [#allocation5], 4
      %s26 = int_to_ptr.vmem [resolvable:$true] %s25
      %31 = dma.hbm_to_vmem [thread:$0]  %s1, 512, %s26, [#allocation6], 64, 64, 4
    $region9: #{attn_forward.1} parent=1 // pred_fallthru
      _
    // Predicated region
    $region10: #{attn_forward.1} parent=1 // pred_check
      _
    $region11: #{attn_forward.1} parent=1 // pred_check_branch
      %33 = sbr.rel (0) target = $region13
    $region12: #{attn_forward.1} parent=1 // pred_region
      %34 = dma.done [#allocation3], 64
    $region13: #{attn_forward.1} parent=1 // pred_fallthru
      _
    // Predicated region
    $region14: #{attn_forward.1} parent=1 // pred_check
      _
    $region15: #{attn_forward.1} parent=1 // pred_check_branch
      %36 = sbr.rel (0) target = $region17
    $region16: #{attn_forward.1} parent=1 // pred_region
      %37 = dma.done [#allocation6], 512
    $region17: #{attn_forward.1} parent=1 // pred_fallthru
      _
    %v38 = vld [vmem:[#allocation2] sm:$0xf]
    %v39 = vld [vmem:[#allocation5] sm:$0xf]
    %v40 = vld [vmem:[#allocation5 + $0x4] sm:$0xf]
    %v41 = vld [vmem:[#allocation5 + $0x8] sm:$0xf]
    %v42 = vld [vmem:[#allocation5 + $0xc] sm:$0xf]
    %v43 = vld [vmem:[#allocation5 + $0x10] sm:$0xf]
    %v44 = vld [vmem:[#allocation5 + $0x14] sm:$0xf]
    %v45 = vld [vmem:[#allocation5 + $0x18] sm:$0xf]
    %v46 = vld [vmem:[#allocation5 + $0x1c] sm:$0xf]
    %v47 = vmul.f32 %v39, %v38
    %v48 = vmul.f32 %v40, %v38
    %v49 = vmul.f32 %v41, %v38
    %v50 = vmul.f32 %v42, %v38
    %v51 = vmul.f32 %v43, %v38
    %v52 = vmul.f32 %v44, %v38
    %v53 = vmul.f32 %v45, %v38
    %v54 = vmul.f32 %v46, %v38
    %vm55 = vcmask 257024
    %v56 = vsel %vm55, %v47, 0.0
    %57 = vadd.xlane.f32.xlu0 %v56
    %v58 = vpop.xlane.xlu0 %57
    %v59 = vsel %vm55, %v48, 0.0
    %60 = vadd.xlane.f32.xlu0 %v59
    %v61 = vpop.xlane.xlu0 %60
    %v62 = vsel %vm55, %v49, 0.0
    %63 = vadd.xlane.f32.xlu0 %v62
    %v64 = vpop.xlane.xlu0 %63
    %v65 = vsel %vm55, %v50, 0.0
    %66 = vadd.xlane.f32.xlu0 %v65
    %v67 = vpop.xlane.xlu0 %66
    %v68 = vsel %vm55, %v51, 0.0
    %69 = vadd.xlane.f32.xlu0 %v68
    %v70 = vpop.xlane.xlu0 %69
    %v71 = vsel %vm55, %v52, 0.0
    %72 = vadd.xlane.f32.xlu0 %v71
    %v73 = vpop.xlane.xlu0 %72
    %v74 = vsel %vm55, %v53, 0.0
    %75 = vadd.xlane.f32.xlu0 %v74
    %v76 = vpop.xlane.xlu0 %75
    %v77 = vsel %vm55, %v54, 0.0
    %78 = vadd.xlane.f32.xlu0 %v77
    %v79 = vpop.xlane.xlu0 %78
    %v88 = vlaneseq
    %v89 = vand.u32 %v88, 127
    %v90 = vlaneseq
    %v91 = vshrl.u32 %v90, 7
    %v92 = vsub.s32 %v89, %v91
    %v93 = vrot.slane %v58, %v92
    %v94 = vlaneseq
    %v95 = vshrl.u32 %v94, 7
    %v96 = vsub.s32 %v89, %v95
    %v97 = vrot.slane %v61, %v96
    %v98 = vlaneseq
    %v99 = vshrl.u32 %v98, 7
    %v100 = vsub.s32 %v89, %v99
    %v101 = vrot.slane %v64, %v100
    %v102 = vlaneseq
    %v103 = vshrl.u32 %v102, 7
    %v104 = vsub.s32 %v89, %v103
    %v105 = vrot.slane %v67, %v104
    %v106 = vlaneseq
    %v107 = vshrl.u32 %v106, 7
    %v108 = vsub.s32 %v89, %v107
    %v109 = vrot.slane %v70, %v108
    %v110 = vlaneseq
    %v111 = vshrl.u32 %v110, 7
    %v112 = vsub.s32 %v89, %v111
    %v113 = vrot.slane %v73, %v112
    %v114 = vlaneseq
    %v115 = vshrl.u32 %v114, 7
    %v116 = vsub.s32 %v89, %v115
    %v117 = vrot.slane %v76, %v116
    %v118 = vlaneseq
    %v119 = vshrl.u32 %v118, 7
    %v120 = vsub.s32 %v89, %v119
    %v121 = vrot.slane %v79, %v120
    %vm122 = vcmask 1041409
    %v123 = vsel %vm122, %v97, %v93
    %vm124 = vcmask 1042434
    %v125 = vsel %vm124, %v101, %v123
    %vm126 = vcmask 1043459
    %v127 = vsel %vm126, %v105, %v125
    %vm128 = vcmask 1044484
    %v129 = vsel %vm128, %v109, %v127
    %vm130 = vcmask 1045509
    %v131 = vsel %vm130, %v113, %v129
    %vm132 = vcmask 1046534
    %v133 = vsel %vm132, %v117, %v131
    %vm134 = vcmask 1047559
    %v135 = vsel %vm134, %v121, %v133
    %137 = vxpose.xlu0.b32.start [1/16] %v135, 128
    %138 = vxpose.xlu0.b32.cont [2/16] 0.0, 128
    %139 = vxpose.xlu0.b32.cont [3/16] 0.0, 128
    %140 = vxpose.xlu0.b32.cont [4/16] 0.0, 128
    %141 = vxpose.xlu0.b32.cont [5/16] 0.0, 128
    %142 = vxpose.xlu0.b32.cont [6/16] 0.0, 128
    %143 = vxpose.xlu0.b32.cont [7/16] 0.0, 128
    %144 = vxpose.xlu0.b32.cont [8/16] 0.0, 128
    %145 = vxpose.xlu0.b32.cont [9/16] 0.0, 128
    %146 = vxpose.xlu0.b32.cont [10/16] 0.0, 128
    %147 = vxpose.xlu0.b32.cont [11/16] 0.0, 128
    %148 = vxpose.xlu0.b32.cont [12/16] 0.0, 128
    %149 = vxpose.xlu0.b32.cont [13/16] 0.0, 128
    %150 = vxpose.xlu0.b32.cont [14/16] 0.0, 128
    %151 = vxpose.xlu0.b32.cont [15/16] 0.0, 128
    %152 = vxpose.xlu0.b32.end [16/16] 0.0, 128
    %v153 = vpop.trf.xlu0
    %v154 = vpop.trf.xlu0
    %v155 = vpop.trf.xlu0
    %v156 = vpop.trf.xlu0
    %v157 = vpop.trf.xlu0
    %v158 = vpop.trf.xlu0
    %v159 = vpop.trf.xlu0
    %v160 = vpop.trf.xlu0
    %v161 = vpop.trf.xlu0
    %v162 = vpop.trf.xlu0
    %v163 = vpop.trf.xlu0
    %v164 = vpop.trf.xlu0
    %v165 = vpop.trf.xlu0
    %v166 = vpop.trf.xlu0
    %v167 = vpop.trf.xlu0
    %v168 = vpop.trf.xlu0
    %vm169 = vcmask 60416
    %v170 = vsel %vm169, %v153, -inf
    %171 = vmax.xlane.f32.xlu0 %v170
    %v172 = vpop.xlane.xlu0 %171
    %v173 = vsub.f32 %v153, %v172
    %v174 = vmul.f32 %v173, 1.442695
    %v175 = vpow.pop %v174
    %v176 = vsel %vm169, %v175, 0.0
    %177 = vadd.xlane.f32.xlu0 %v176
    %v178 = vpop.xlane.xlu0 %177
    %v179 = vrcp.pop %v178
    %v180 = vmul.f32 %v175, %v179
    %181 = vst.msk [vmem:[#allocation7] sm:$0xf] %vm169, %v180
    // Predicated region
    $region18: #{attn_forward.1} parent=1 // pred_check
      _
    $region19: #{attn_forward.1} parent=1 // pred_check_branch
      %183 = sbr.rel (0) target = $region21
    $region20: #{attn_forward.1} parent=1 // pred_region
      %s185 = ssub.s32 64, 64
      %186 = vsyncadd [#allocation4], %s185
      %s188 = sshll.u32 [#allocation7], 4
      %s189 = int_to_ptr.vmem [resolvable:$true] %s188
      %191 = dma.vmem_to_hbm [thread:$0]  %s189, 64, %s2, [#allocation4]
    $region21: #{attn_forward.1} parent=1 // pred_fallthru
      _
    // Predicated region
    $region22: #{attn_forward.1} parent=1 // pred_check
      _
    $region23: #{attn_forward.1} parent=1 // pred_check_branch
      %193 = sbr.rel (0) target = $region25
    $region24: #{attn_forward.1} parent=1 // pred_region
      %194 = dma.done [#allocation4], 64
    $region25: #{attn_forward.1} parent=1 // pred_fallthru
      _
    %195 = vsyncpa [#allocation3], 1
    %196 = vsyncpa [#allocation6], 1
    %197 = vsyncpa [#allocation4], 1

</llo_original>
